<compile_context>
chip_gen: v6e
topology: v6e:2x2x1
jax: 0.10.0
libtpu: 0.0.40
codegen_flags: <defaults>
</compile_context>

<pallas_src>
import jax
import jax.numpy as jnp
import numpy as np
from jax.experimental import pallas as pl
from jax.experimental.pallas import tpu as pltpu


def _cdiv(a, b):
    return -(-a // b)


def _round_up(a, m):
    return ((a + m - 1) // m) * m


def _mlp_kernel(x_ref, w1_ref, b1_ref, w2_ref, b2_ref, o_ref):
    # x_ref: (tm, C_in)   w1_ref: (C_in, Hp) bf16   b1_ref: (1, Hp) bf16
    # w2_ref: (Hp, Cp) bf16   b2_ref: (1, Cp) bf16   o_ref: (tm, Cp)
    x = x_ref[...].astype(jnp.bfloat16)                       # bf16 MXU inputs
    h = jnp.dot(x, w1_ref[...], preferred_element_type=jnp.float32)
    h = h + b1_ref[...].astype(jnp.float32)
    # TODO(synk): torch.nn.GELU() defaults to exact erf; the tanh approximation
    # (deviation ~1e-3) is used because it lowers cleanly (EUP tanh).
    h = jax.nn.gelu(h, approximate=True)
    # nn.Dropout(p=0.0) / eval-mode dropout is the identity.
    # TODO(synk): training-mode dropout (p > 0) would need in-kernel PRNG.
    out = jnp.dot(h.astype(jnp.bfloat16), w2_ref[...],
                  preferred_element_type=jnp.float32)
    out = out + b2_ref[...].astype(jnp.float32)
    o_ref[...] = out.astype(o_ref.dtype)


def _select_row_tile(m, block_m, *, align=16, min_tiles=2):
    """Pick (tm, m_pad): tm a multiple of `align`, >= min_tiles tiles when the
    row count allows it (v7x megacore), padding waste bounded (~align/tile)."""
    m_al = _round_up(m, align)
    n = max(min_tiles, _cdiv(m_al, block_m))
    tm = max(align, _round_up(_cdiv(m_al, n), align))
    n = _cdiv(m, tm)
    return tm, n * tm


def _vmem_limit_bytes(tm, c_in, h_p, c_out_p, x_itemsize, o_itemsize):
    w_bytes = 2  # bf16 weights/biases, single-buffered (Buffered(1))
    need = (
        2 * tm * c_in * x_itemsize              # x tile, double-buffered
        + 2 * tm * c_out_p * o_itemsize         # out tile, double-buffered
        + (c_in * h_p + h_p + h_p * c_out_p + c_out_p) * w_bytes
        + tm * h_p * 4 + tm * c_out_p * 4       # f32 intermediates
        + tm * max(h_p, c_in) * 2               # bf16 casts feeding the MXU
    )
    limit = max(2 * need, 32 * 1024 * 1024)     # generous compiler-scratch headroom
    try:
        cap = pltpu.get_tpu_info().vmem_capacity_bytes
    except Exception:
        cap = 64 * 1024 * 1024                  # v7x per-TC VMEM (smallest gen)
    return int(min(limit, int(cap * 0.9)))


def mlp_pallas(x, w1, b1, w2, b2, *, out_features=None, block_m=1024):
    """Fused MLP: gelu(x @ w1 + b1) @ w2 + b2 over the last axis of x."""
    *lead, c_in = x.shape
    hidden = w1.shape[1]
    c_out_full = w2.shape[1]
    c_out = int(out_features) if out_features is not None else c_out_full

    # ---- weight prep: bf16, feature dims padded to lane multiples (128) ----
    w1 = w1.astype(jnp.bfloat16)
    b1 = b1.reshape(1, hidden).astype(jnp.bfloat16)
    w2 = w2.astype(jnp.bfloat16)
    b2 = b2.reshape(1, c_out_full).astype(jnp.bfloat16)
    h_p = _round_up(hidden, 128)
    c_out_p = _round_up(c_out_full, 128)
    if h_p != hidden:
        w1 = jnp.pad(w1, ((0, 0), (0, h_p - hidden)))
        b1 = jnp.pad(b1, ((0, 0), (0, h_p - hidden)))
        w2 = jnp.pad(w2, ((0, h_p - hidden), (0, 0)))
    if c_out_p != c_out_full:
        w2 = jnp.pad(w2, ((0, 0), (0, c_out_p - c_out_full)))
        b2 = jnp.pad(b2, ((0, 0), (0, c_out_p - c_out_full)))

    # ---- row tiling (tokens flattened) -------------------------------------
    x2 = x.reshape(-1, c_in)
    m = x2.shape[0]
    tm, m_pad = _select_row_tile(m, block_m)
    if m_pad != m:
        x2 = jnp.pad(x2, ((0, m_pad - m), (0, 0)))
    grid = (m_pad // tm,)

    def _const_spec(shape):
        # Constant index_map -> block never changes -> single-buffer it.
        return pl.BlockSpec(shape, lambda i: (0, 0), pipeline_mode=pl.Buffered(1))

    out = pl.pallas_call(
        _mlp_kernel,
        out_shape=jax.ShapeDtypeStruct((m_pad, c_out_p), x.dtype),
        grid_spec=pltpu.PrefetchScalarGridSpec(
            num_scalar_prefetch=0,
            grid=grid,
            in_specs=[
                pl.BlockSpec((tm, c_in), lambda i: (i, 0)),  # x tile (pipelined)
                _const_spec((c_in, h_p)),                    # w1 (resident)
                _const_spec((1, h_p)),                       # b1 (resident)
                _const_spec((h_p, c_out_p)),                 # w2 (resident)
                _const_spec((1, c_out_p)),                   # b2 (resident)
            ],
            out_specs=pl.BlockSpec((tm, c_out_p), lambda i: (i, 0)),
        ),
        compiler_params=pltpu.CompilerParams(
            dimension_semantics=("parallel",),
            vmem_limit_bytes=_vmem_limit_bytes(
                tm, c_in, h_p, c_out_p,
                x2.dtype.itemsize, jnp.dtype(x.dtype).itemsize),
        ),
    )(x2, w1, b1, w2, b2)

    if m_pad != m:
        out = out[:m]
    if c_out_p != c_out:
        out = out[:, :c_out]
    return out.reshape(*lead, c_out)


class Mlp:
    """JAX/Pallas counterpart of the PyTorch Mlp module (eval-mode dropout)."""

    def __init__(self, in_features, hidden_features=None, out_features=None,
                 drop=0.0, *, key=None):
        out_features = out_features or in_features
        hidden_features = hidden_features or in_features
        if key is None:
            key = jax.random.PRNGKey(0)
        k1, k2, k3, k4 = jax.random.split(key, 4)
        lim1 = 1.0 / float(np.sqrt(in_features))
        lim2 = 1.0 / float(np.sqrt(hidden_features))
        # Weights stored as (in, out) bf16 so the kernel does x @ W at the
        # native MXU rate (f32 accumulation preserved in-kernel).
        self.w1 = jax.random.uniform(k1, (in_features, hidden_features),
                                     jnp.float32, -lim1, lim1).astype(jnp.bfloat16)
        self.b1 = jax.random.uniform(k2, (hidden_features,),
                                     jnp.float32, -lim1, lim1).astype(jnp.bfloat16)
        self.w2 = jax.random.uniform(k3, (hidden_features, out_features),
                                     jnp.float32, -lim2, lim2).astype(jnp.bfloat16)
        self.b2 = jax.random.uniform(k4, (out_features,),
                                     jnp.float32, -lim2, lim2).astype(jnp.bfloat16)
        self.out_features = out_features
        self.drop = drop  # identity for p=0 / eval mode (see TODO in kernel)

    def __call__(self, x):
        return mlp_pallas(x, self.w1, self.b1, self.w2, self.b2,
                          out_features=self.out_features)


if __name__ == "__main__":
    key = jax.random.PRNGKey(0)
    B, N, C, H = 2, 8, 32, 64
    kx, kp = jax.random.split(key)
    x = jax.random.normal(kx, (B, N, C), dtype=jnp.float32)

    mlp = Mlp(in_features=C, hidden_features=H, key=kp)
    y = jax.block_until_ready(mlp(x))
    assert y.shape == (B, N, C)

    # Pure-numpy f32 reference using the exact bf16 weight values the kernel
    # sees (x stays f32 in the reference; the kernel casts it to bf16, hence
    # the slightly loosened tolerance).
    xn = np.asarray(x, np.float32).reshape(-1, C)
    w1 = np.asarray(jnp.asarray(mlp.w1, jnp.float32))
    b1 = np.asarray(jnp.asarray(mlp.b1, jnp.float32))
    w2 = np.asarray(jnp.asarray(mlp.w2, jnp.float32))
    b2 = np.asarray(jnp.asarray(mlp.b2, jnp.float32))
    h = xn @ w1 + b1
    g = 0.5 * h * (1.0 + np.tanh(np.sqrt(2.0 / np.pi) * (h + 0.044715 * h ** 3)))
    ref = (g @ w2 + b2).reshape(B, N, -1)

    np.testing.assert_allclose(np.asarray(y), ref, rtol=3e-2, atol=3e-2)
    print("KERNEL_OK")
</pallas_src>

<mosaic_0001>
module attributes {stable_mosaic.version = 11 : i64} {
  func.func @_mlp_kernel(%arg0: i32, %arg1: memref<16x32xf32, #tpu.memory_space<vmem>>, %arg2: memref<32x128xbf16, #tpu.memory_space<vmem>>, %arg3: memref<1x128xbf16, #tpu.memory_space<vmem>>, %arg4: memref<128x128xbf16, #tpu.memory_space<vmem>>, %arg5: memref<1x128xbf16, #tpu.memory_space<vmem>>, %arg6: memref<16x128xf32, #tpu.memory_space<vmem>>) attributes {dimension_semantics = [#tpu.dimension_semantics<parallel>], iteration_bounds = array<i64: 1>, scalar_prefetch = 0 : i64, scratch_operands = 0 : i64, tpu.core_type = #tpu.core_type<tc>, window_params = [{transform_indices = @transform_0, window_bounds = array<i64: 16, 32>}, {pipeline_mode = #tpu.pipeline_mode<synchronous>, transform_indices = @transform_1, window_bounds = array<i64: 32, 128>}, {pipeline_mode = #tpu.pipeline_mode<synchronous>, transform_indices = @transform_2, window_bounds = array<i64: 1, 128>}, {pipeline_mode = #tpu.pipeline_mode<synchronous>, transform_indices = @transform_3, window_bounds = array<i64: 128, 128>}, {pipeline_mode = #tpu.pipeline_mode<synchronous>, transform_indices = @transform_4, window_bounds = array<i64: 1, 128>}, {transform_indices = @transform_5, window_bounds = array<i64: 16, 128>}]} {
    %c0 = arith.constant 0 : index
    %c0_0 = arith.constant 0 : index
    %0 = vector.load %arg1[%c0, %c0_0] : memref<16x32xf32, #tpu.memory_space<vmem>>, vector<16x32xf32>
    %1 = arith.truncf %0 : vector<16x32xf32> to vector<16x32xbf16>
    %c0_1 = arith.constant 0 : index
    %c0_2 = arith.constant 0 : index
    %2 = vector.load %arg2[%c0_1, %c0_2] : memref<32x128xbf16, #tpu.memory_space<vmem>>, vector<32x128xbf16>
    %cst = arith.constant dense<0.000000e+00> : vector<16x128xf32>
    %3 = tpu.matmul %1, %2, %cst {dimension_numbers = #tpu.dot_dimension_numbers<[1], [0], [0], [1], [0, 0, 1, 1], [], []>} : vector<16x32xbf16>, vector<32x128xbf16>, vector<16x128xf32> -> vector<16x128xf32>
    %c0_3 = arith.constant 0 : index
    %c0_4 = arith.constant 0 : index
    %4 = vector.load %arg3[%c0_3, %c0_4] : memref<1x128xbf16, #tpu.memory_space<vmem>>, vector<1x128xbf16>
    %5 = arith.extf %4 : vector<1x128xbf16> to vector<1x128xf32>
    %6 = vector.broadcast %5 : vector<1x128xf32> to vector<16x128xf32>
    %7 = arith.addf %3, %6 : vector<16x128xf32>
    %8 = arith.mulf %7, %7 : vector<16x128xf32>
    %9 = arith.mulf %7, %8 : vector<16x128xf32>
    %cst_5 = arith.constant 4.471500e-02 : f32
    %10 = vector.broadcast %cst_5 : f32 to vector<16x128xf32>
    %11 = arith.mulf %10, %9 : vector<16x128xf32>
    %12 = arith.addf %7, %11 : vector<16x128xf32>
    %cst_6 = arith.constant 0.797884583 : f32
    %13 = vector.broadcast %cst_6 : f32 to vector<16x128xf32>
    %14 = arith.mulf %13, %12 : vector<16x128xf32>
    %15 = math.tanh %14 : vector<16x128xf32>
    %cst_7 = arith.constant 1.000000e+00 : f32
    %16 = vector.broadcast %cst_7 : f32 to vector<16x128xf32>
    %17 = arith.addf %16, %15 : vector<16x128xf32>
    %cst_8 = arith.constant 5.000000e-01 : f32
    %18 = vector.broadcast %cst_8 : f32 to vector<16x128xf32>
    %19 = arith.mulf %18, %17 : vector<16x128xf32>
    %20 = arith.mulf %7, %19 : vector<16x128xf32>
    %21 = arith.truncf %20 : vector<16x128xf32> to vector<16x128xbf16>
    %c0_9 = arith.constant 0 : index
    %c0_10 = arith.constant 0 : index
    %22 = vector.load %arg4[%c0_9, %c0_10] : memref<128x128xbf16, #tpu.memory_space<vmem>>, vector<128x128xbf16>
    %cst_11 = arith.constant dense<0.000000e+00> : vector<16x128xf32>
    %23 = tpu.matmul %21, %22, %cst_11 {dimension_numbers = #tpu.dot_dimension_numbers<[1], [0], [0], [1], [0, 0, 1, 1], [], []>} : vector<16x128xbf16>, vector<128x128xbf16>, vector<16x128xf32> -> vector<16x128xf32>
    %c0_12 = arith.constant 0 : index
    %c0_13 = arith.constant 0 : index
    %24 = vector.load %arg5[%c0_12, %c0_13] : memref<1x128xbf16, #tpu.memory_space<vmem>>, vector<1x128xbf16>
    %25 = arith.extf %24 : vector<1x128xbf16> to vector<1x128xf32>
    %26 = vector.broadcast %25 : vector<1x128xf32> to vector<16x128xf32>
    %27 = arith.addf %23, %26 : vector<16x128xf32>
    %c0_14 = arith.constant 0 : index
    %c0_15 = arith.constant 0 : index
    %28 = vector.load %arg6[%c0_14, %c0_15] : memref<16x128xf32, #tpu.memory_space<vmem>>, vector<16x128xf32>
    tpu.vector_store %arg6[%c0_14, %c0_15], %27 {strides = array<i32>} : memref<16x128xf32, #tpu.memory_space<vmem>>, vector<16x128xf32>,
    return
  }
  func.func @transform_0(%arg0: i32) -> (i32, i32) {
    %c0_i32 = arith.constant 0 : i32
    %c0_i32_0 = arith.constant 0 : i32
    return %arg0, %c0_i32 : i32, i32
  }
  func.func @transform_1(%arg0: i32) -> (i32, i32) {
    %c0_i32 = arith.constant 0 : i32
    %c0_i32_0 = arith.constant 0 : i32
    %c0_i32_1 = arith.constant 0 : i32
    return %c0_i32, %c0_i32_0 : i32, i32
  }
  func.func @transform_2(%arg0: i32) -> (i32, i32) {
    %c0_i32 = arith.constant 0 : i32
    %c0_i32_0 = arith.constant 0 : i32
    %c0_i32_1 = arith.constant 0 : i32
    return %c0_i32, %c0_i32_0 : i32, i32
  }
  func.func @transform_3(%arg0: i32) -> (i32, i32) {
    %c0_i32 = arith.constant 0 : i32
    %c0_i32_0 = arith.constant 0 : i32
    %c0_i32_1 = arith.constant 0 : i32
    return %c0_i32, %c0_i32_0 : i32, i32
  }
  func.func @transform_4(%arg0: i32) -> (i32, i32) {
    %c0_i32 = arith.constant 0 : i32
    %c0_i32_0 = arith.constant 0 : i32
    %c0_i32_1 = arith.constant 0 : i32
    return %c0_i32, %c0_i32_0 : i32, i32
  }
  func.func @transform_5(%arg0: i32) -> (i32, i32) {
    %c0_i32 = arith.constant 0 : i32
    %c0_i32_0 = arith.constant 0 : i32
    return %arg0, %c0_i32 : i32, i32
  }
}

</mosaic_0001>

<llo_original>
// kernel: tpu_custom_call.1
$region0: #{tpu_custom_call.1}
  #allocation0 [shape = 'u32[]', space=smem, size = 0x4, offset = 0x4, fixed_abs, tag = 'smem constant byte address 0x4 - core index']
  #allocation1 [shape = 'u32[144,128]{1,0:T(1,128)}', space=vmem, size = 0x12000, scoped, tag = 'internal scratch']
  %s0 = inlined_call_operand.hbm [shape: f32[16,32], index: 0, kind: input, shape index: {}]
  %s1 = inlined_call_operand.hbm [shape: bf16[32,128], index: 1, kind: input, shape index: {}]
  %s2 = inlined_call_operand.vmem [shape: bf16[1,128], index: 2, kind: input, shape index: {}]
  %s3 = inlined_call_operand.hbm [shape: bf16[128,128], index: 3, kind: input, shape index: {}]
  %s4 = inlined_call_operand.vmem [shape: bf16[1,128], index: 4, kind: input, shape index: {}]
  %s5 = inlined_call_operand.hbm [shape: f32[16,128], index: 5, kind: output, shape index: {}]
  %s6 = sld [smem:[#allocation0]]
  $region42: #{tpu_custom_call.1} parent=0
    _
  %s8 = ssub.s32 1, %s6
  %s9 = scalar_select 0, %s8, %s6
  $region1: #{tpu_custom_call.1} parent=0
    #allocation2 [shape = 'u8[8192]{0}', space=vmem, size = 0x2000, scoped, tag = 'input window, operand 0, single buffered']
    #allocation3 [shape = 's32[1]{0}', space=sflag, size = 0x4, scoped, tag = 'scoped memory for tpu_custom_call.1']
    #allocation4 [shape = 's32[1]{0}', space=sflag, size = 0x4, scoped, tag = 'scoped memory for tpu_custom_call.1']
    #allocation5 [shape = 'u8[8192]{0}', space=vmem, size = 0x2000, scoped, tag = 'input window, operand 1, single buffered']
    #allocation6 [shape = 's32[1]{0}', space=sflag, size = 0x4, scoped, tag = 'scoped memory for tpu_custom_call.1']
    #allocation7 [shape = 'u8[32768]{0}', space=vmem, size = 0x8000, scoped, tag = 'input window, operand 3, single buffered']
    #allocation8 [shape = 'u8[8192]{0}', space=vmem, size = 0x2000, scoped, tag = 'output window, operand 0, single buffered']
    %10 = vsyncpa [#allocation3], 0
    %11 = vsyncpa [#allocation6], 0
    %12 = vsyncpa [#allocation4], 0
    // Predicated region
    $region2: #{tpu_custom_call.1} parent=1 // pred_check
      _
    $region3: #{tpu_custom_call.1} parent=1 // pred_check_branch
      %14 = sbr.rel (0) target = $region5
    $region4: #{tpu_custom_call.1} parent=1 // pred_region
      %s16 = ssub.s32 256, 256
      %17 = vsyncadd [#allocation3], %s16
      %s18 = sshll.u32 [#allocation2], 4
      %s19 = int_to_ptr.vmem [resolvable:$true] %s18
      %24 = dma.hbm_to_vmem [thread:$0]  %s0, 256, %s19, [#allocation3], 128, 128, 8
    $region5: #{tpu_custom_call.1} parent=1 // pred_fallthru
      _
    // Predicated region
    $region6: #{tpu_custom_call.1} parent=1 // pred_check
      _
    $region7: #{tpu_custom_call.1} parent=1 // pred_check_branch
      %26 = sbr.rel (0) target = $region9
    $region8: #{tpu_custom_call.1} parent=1 // pred_region
      %s28 = ssub.s32 256, 256
      %29 = vsyncadd [#allocation6], %s28
      %s30 = sshll.u32 [#allocation5], 4
      %s31 = int_to_ptr.vmem [resolvable:$true] %s30
      %36 = dma.hbm_to_vmem [thread:$0]  %s1, 256, %s31, [#allocation6], 64, 64, 4
    $region9: #{tpu_custom_call.1} parent=1 // pred_fallthru
      _
    // Predicated region
    $region10: #{tpu_custom_call.1} parent=1 // pred_check
      _
    $region11: #{tpu_custom_call.1} parent=1 // pred_check_branch
      %38 = sbr.rel (0) target = $region13
    $region12: #{tpu_custom_call.1} parent=1 // pred_region
      _
    $region13: #{tpu_custom_call.1} parent=1 // pred_fallthru
      _
    // Predicated region
    $region14: #{tpu_custom_call.1} parent=1 // pred_check
      _
    $region15: #{tpu_custom_call.1} parent=1 // pred_check_branch
      %40 = sbr.rel (0) target = $region17
    $region16: #{tpu_custom_call.1} parent=1 // pred_region
      %s42 = ssub.s32 1024, 1024
      %43 = vsyncadd [#allocation6], %s42
      %s44 = sshll.u32 [#allocation7], 4
      %s45 = int_to_ptr.vmem [resolvable:$true] %s44
      %50 = dma.hbm_to_vmem [thread:$0]  %s3, 1024, %s45, [#allocation6], 64, 64, 4
    $region17: #{tpu_custom_call.1} parent=1 // pred_fallthru
      _
    // Predicated region
    $region18: #{tpu_custom_call.1} parent=1 // pred_check
      _
    $region19: #{tpu_custom_call.1} parent=1 // pred_check_branch
      %52 = sbr.rel (0) target = $region21
    $region20: #{tpu_custom_call.1} parent=1 // pred_region
      _
    $region21: #{tpu_custom_call.1} parent=1 // pred_fallthru
      _
    // Predicated region
    $region22: #{tpu_custom_call.1} parent=1 // pred_check
      _
    $region23: #{tpu_custom_call.1} parent=1 // pred_check_branch
      %54 = sbr.rel (0) target = $region25
    $region24: #{tpu_custom_call.1} parent=1 // pred_region
      %55 = dma.done [#allocation3], 256
    $region25: #{tpu_custom_call.1} parent=1 // pred_fallthru
      _
    // Predicated region
    $region26: #{tpu_custom_call.1} parent=1 // pred_check
      _
    $region27: #{tpu_custom_call.1} parent=1 // pred_check_branch
      %57 = sbr.rel (0) target = $region29
    $region28: #{tpu_custom_call.1} parent=1 // pred_region
      %58 = dma.done [#allocation6], 256
    $region29: #{tpu_custom_call.1} parent=1 // pred_fallthru
      _
    // Predicated region
    $region30: #{tpu_custom_call.1} parent=1 // pred_check
      _
    $region31: #{tpu_custom_call.1} parent=1 // pred_check_branch
      %60 = sbr.rel (0) target = $region33
    $region32: #{tpu_custom_call.1} parent=1 // pred_region
      %61 = dma.done [#allocation6], 1024
    $region33: #{tpu_custom_call.1} parent=1 // pred_fallthru
      _
    %v63 = vld [vmem:[#allocation2] sm:$0xff]
    %v64 = vld [vmem:[#allocation2 + $0x8] sm:$0xff]
    %v65 = vpack.c.bf16 %v64, %v63
    %v66 = vld [vmem:[#allocation5] sm:$0xf]
    %v67 = vld [vmem:[#allocation5 + $0x4] sm:$0xf]
    %v68 = vld [vmem:[#allocation5 + $0x8] sm:$0xf]
    %v69 = vld [vmem:[#allocation5 + $0xc] sm:$0xf]
    %v70 = vld [vmem:[%s2] sm:$0x1]
    %v71 = vunpack.c.l.bf16 %v70
    %v72 = vlaneseq
    %v73 = vshrl.u32 %v72, 7
    %v74 = vsub.s32 0, %v73
    %v75 = vrot.slane %v71, %v74
    %v80 = vunpack.c.l.b16 %v66
    %v81 = vunpack.c.l.b16 %v67
    %v82 = vunpack.c.l.b16 %v68
    %v83 = vunpack.c.l.b16 %v69
    %v84 = vpack.c.b16 %v81, %v80
    %v85 = vpack.c.b16 %v83, %v82
    %vm88 = vcmask 261120
    %v90 = vsel %vm88, %v65, 0
    %92 = vmatprep.subr.bf16.mxu0 0
    %93 = vmatpush1.bf16.msra.mxu0 0
    %94 = vmatprep.subr.bf16.mxu0 0
    %95 = vmatpush1.bf16.msra.mxu0 0
    %96 = vmatprep.subr.bf16.mxu0 0
    %97 = vmatpush1.bf16.msra.mxu0 0
    %98 = vmatprep.subr.bf16.mxu0 0
    %99 = vmatpush1.bf16.msra.mxu0 0
    %100 = vmatprep.subr.bf16.mxu0 0
    %101 = vmatpush1.bf16.msra.mxu0 0
    %102 = vmatprep.subr.bf16.mxu0 0
    %103 = vmatpush1.bf16.msra.mxu0 0
    %104 = vmatprep.subr.bf16.mxu0 0
    %105 = vmatpush1.bf16.msra.mxu0 %v85
    %106 = vmatprep.subr.bf16.mxu0 0
    %107 = vmatpush1.bf16.msra.mxu0 %v84
    %108 = vmatprep.subr.bf16.mxu0 0
    %109 = vmatpush2.bf16.msra.mxu0 0
    %110 = vmatprep.subr.bf16.mxu0 0
    %111 = vmatpush2.bf16.msra.mxu0 0
    %112 = vmatprep.subr.bf16.mxu0 0
    %113 = vmatpush2.bf16.msra.mxu0 0
    %114 = vmatprep.subr.bf16.mxu0 0
    %115 = vmatpush2.bf16.msra.mxu0 0
    %116 = vmatprep.subr.bf16.mxu0 0
    %117 = vmatpush2.bf16.msra.mxu0 0
    %118 = vmatprep.subr.bf16.mxu0 0
    %119 = vmatpush2.bf16.msra.mxu0 0
    %120 = vmatprep.subr.bf16.mxu0 0
    %121 = vmatpush2.bf16.msra.mxu0 0
    %122 = vmatprep.subr.bf16.mxu0 0
    %123 = vmatpush2.bf16.msra.mxu0 0
    %124 = vmatprep.mubr.bf16.mxu0 0
    %125 = vmatmul.mubr.bf16.gmra.mxu0 %v90
    %v126 = vpop.f32.mrf.mxu0
    %v127 = vadd.f32 %v75, %v126
    %v128 = vpop.f32.mrf.mxu0
    %v129 = vpop.f32.mrf.mxu0
    %v130 = vadd.f32 %v75, %v129
    %v131 = vpop.f32.mrf.mxu0
    %132 = vdwg.mxu0
    %v133 = vmul.f32 %v127, %v127
    %v134 = vmul.f32 %v130, %v130
    %v135 = vmul.f32 %v127, %v133
    %v136 = vmul.f32 %v130, %v134
    %v137 = vmul.f32 %v135, 0.044715
    %v138 = vmul.f32 %v136, 0.044715
    %v139 = vadd.f32 %v127, %v137
    %v140 = vadd.f32 %v130, %v138
    %v141 = vmul.f32 %v139, 0.7978846
    %v142 = vmul.f32 %v140, 0.7978846
    %v143 = vtanh.pop %v141
    %v144 = vtanh.pop %v142
    %v145 = vadd.f32 %v143, 1.0
    %v146 = vadd.f32 %v144, 1.0
    %v147 = vmul.f32 %v145, 0.5
    %v148 = vmul.f32 %v146, 0.5
    %v149 = vmul.f32 %v127, %v147
    %v150 = vmul.f32 %v130, %v148
    %v151 = vpack.c.bf16 %v150, %v149
    %v152 = vld [vmem:[#allocation7] sm:$0xf]
    %v153 = vld [vmem:[#allocation7 + $0x4] sm:$0xf]
    %v154 = vld [vmem:[#allocation7 + $0x8] sm:$0xf]
    %v155 = vld [vmem:[#allocation7 + $0xc] sm:$0xf]
    %v156 = vld [vmem:[#allocation7 + $0x10] sm:$0xf]
    %v157 = vld [vmem:[#allocation7 + $0x14] sm:$0xf]
    %v158 = vld [vmem:[#allocation7 + $0x18] sm:$0xf]
    %v159 = vld [vmem:[#allocation7 + $0x1c] sm:$0xf]
    %v160 = vld [vmem:[#allocation7 + $0x20] sm:$0xf]
    %v161 = vld [vmem:[#allocation7 + $0x24] sm:$0xf]
    %v162 = vld [vmem:[#allocation7 + $0x28] sm:$0xf]
    %v163 = vld [vmem:[#allocation7 + $0x2c] sm:$0xf]
    %v164 = vld [vmem:[#allocation7 + $0x30] sm:$0xf]
    %v165 = vld [vmem:[#allocation7 + $0x34] sm:$0xf]
    %v166 = vld [vmem:[#allocation7 + $0x38] sm:$0xf]
    %v167 = vld [vmem:[#allocation7 + $0x3c] sm:$0xf]
    %v168 = vld [vmem:[%s4] sm:$0x1]
    %v169 = vunpack.c.l.bf16 %v168
    %v170 = vlaneseq
    %v171 = vshrl.u32 %v170, 7
    %v172 = vsub.s32 0, %v171
    %v173 = vrot.slane %v169, %v172
    %v190 = vunpack.c.l.b16 %v152
    %v191 = vunpack.c.l.b16 %v153
    %v192 = vunpack.c.l.b16 %v154
    %v193 = vunpack.c.l.b16 %v155
    %v194 = vunpack.c.l.b16 %v156
    %v195 = vunpack.c.l.b16 %v157
    %v196 = vunpack.c.l.b16 %v158
    %v197 = vunpack.c.l.b16 %v159
    %v198 = vunpack.c.l.b16 %v160
    %v199 = vunpack.c.l.b16 %v161
    %v200 = vunpack.c.l.b16 %v162
    %v201 = vunpack.c.l.b16 %v163
    %v202 = vunpack.c.l.b16 %v164
    %v203 = vunpack.c.l.b16 %v165
    %v204 = vunpack.c.l.b16 %v166
    %v205 = vunpack.c.l.b16 %v167
    %v206 = vpack.c.b16 %v191, %v190
    %v207 = vpack.c.b16 %v193, %v192
    %v208 = vpack.c.b16 %v195, %v194
    %v209 = vpack.c.b16 %v197, %v196
    %v210 = vpack.c.b16 %v199, %v198
    %v211 = vpack.c.b16 %v201, %v200
    %v212 = vpack.c.b16 %v203, %v202
    %v213 = vpack.c.b16 %v205, %v204
    %222 = vmatprep.subr.bf16.mxu0 0
    %223 = vmatpush1.bf16.msra.mxu0 %v213
    %224 = vmatprep.subr.bf16.mxu0 0
    %225 = vmatpush1.bf16.msra.mxu0 %v212
    %226 = vmatprep.subr.bf16.mxu0 0
    %227 = vmatpush1.bf16.msra.mxu0 %v211
    %228 = vmatprep.subr.bf16.mxu0 0
    %229 = vmatpush1.bf16.msra.mxu0 %v210
    %230 = vmatprep.subr.bf16.mxu0 0
    %231 = vmatpush1.bf16.msra.mxu0 %v209
    %232 = vmatprep.subr.bf16.mxu0 0
    %233 = vmatpush1.bf16.msra.mxu0 %v208
    %234 = vmatprep.subr.bf16.mxu0 0
    %235 = vmatpush1.bf16.msra.mxu0 %v207
    %236 = vmatprep.subr.bf16.mxu0 0
    %237 = vmatpush1.bf16.msra.mxu0 %v206
    %238 = vmatprep.subr.bf16.mxu0 0
    %239 = vmatpush2.bf16.msra.mxu0 0
    %240 = vmatprep.subr.bf16.mxu0 0
    %241 = vmatpush2.bf16.msra.mxu0 0
    %242 = vmatprep.subr.bf16.mxu0 0
    %243 = vmatpush2.bf16.msra.mxu0 0
    %244 = vmatprep.subr.bf16.mxu0 0
    %245 = vmatpush2.bf16.msra.mxu0 0
    %246 = vmatprep.subr.bf16.mxu0 0
    %247 = vmatpush2.bf16.msra.mxu0 0
    %248 = vmatprep.subr.bf16.mxu0 0
    %249 = vmatpush2.bf16.msra.mxu0 0
    %250 = vmatprep.subr.bf16.mxu0 0
    %251 = vmatpush2.bf16.msra.mxu0 0
    %252 = vmatprep.subr.bf16.mxu0 0
    %253 = vmatpush2.bf16.msra.mxu0 0
    %254 = vmatprep.mubr.bf16.mxu0 0
    %255 = vmatmul.mubr.bf16.gmra.mxu0 %v151
    %v256 = vpop.f32.mrf.mxu0
    %v257 = vadd.f32 %v173, %v256
    %v258 = vpop.f32.mrf.mxu0
    %v259 = vpop.f32.mrf.mxu0
    %v260 = vadd.f32 %v173, %v259
    %v261 = vpop.f32.mrf.mxu0
    %262 = vdwg.mxu0
    %263 = vst [vmem:[#allocation8] sm:$0xff] %v257
    %264 = vst [vmem:[#allocation8 + $0x8] sm:$0xff] %v260
    // Predicated region
    $region34: #{tpu_custom_call.1} parent=1 // pred_check
      _
    $region35: #{tpu_custom_call.1} parent=1 // pred_check_branch
      %266 = sbr.rel (0) target = $region37
    $region36: #{tpu_custom_call.1} parent=1 // pred_region
      %s268 = ssub.s32 256, 256
      %269 = vsyncadd [#allocation4], %s268
      %s270 = sshll.u32 [#allocation8], 4
      %s271 = int_to_ptr.vmem [resolvable:$true] %s270
      %276 = dma.vmem_to_hbm [thread:$0]  %s271, 256, %s5, [#allocation4], 128, 128, 8
    $region37: #{tpu_custom_call.1} parent=1 // pred_fallthru
      _
    // Predicated region
    $region38: #{tpu_custom_call.1} parent=1 // pred_check
      _
    $region39: #{tpu_custom_call.1} parent=1 // pred_check_branch
      %278 = sbr.rel (0) target = $region41
    $region40: #{tpu_custom_call.1} parent=1 // pred_region
      %279 = dma.done [#allocation4], 256
    $region41: #{tpu_custom_call.1} parent=1 // pred_fallthru
      _
    %280 = vsyncpa [#allocation3], 1
    %281 = vsyncpa [#allocation6], 1
    %282 = vsyncpa [#allocation4], 1

</llo_original>
